<compile_context>
chip_gen: v7x
topology: tpu7x:2x2x1
jax: 0.10.0
libtpu: 0.0.40
codegen_flags: <defaults>
</compile_context>

<pallas_src>
import functools

import jax
import jax.numpy as jnp
from jax.experimental import pallas as pl
from jax.experimental.pallas import tpu as pltpu


def _permute_kernel(perm_ref, x_ref, o_ref, *, precision):
    """out[:, j] = x[:, perm[j]]  <=>  out = x @ M,  M[i, j] = (i == perm[j]).

    The (d, tn) one-hot slice is rebuilt in-kernel from the tiny perm row
    (VPU filler under the MXU-bound dot) — no d*d matrix ever touches HBM.
    """
    d = x_ref.shape[-1]      # full (un-tiled) feature dim = K
    tn = o_ref.shape[-1]     # output-feature tile = N
    row_ids = jax.lax.broadcasted_iota(jnp.int32, (d, tn), 0)
    onehot = (row_ids == perm_ref[...]).astype(x_ref.dtype)   # (1, tn) bcast over rows
    o_ref[...] = jnp.dot(
        x_ref[...],
        onehot,
        preferred_element_type=jnp.float32,
        precision=precision,              # HIGHEST only for f32 inputs
    ).astype(o_ref.dtype)


def _vmem_capacity_bytes():
    try:
        return int(pltpu.get_tpu_info().vmem_capacity_bytes)
    except Exception:
        return 64 << 20   # v7x-safe default if the query is unavailable


def _fold_factor(batch, d):
    """Fold f rows into one so the lane (feature) dim reaches 128.

    Only when it is a free row-major reshape: d divides 128 and batch % f == 0.
    """
    if d >= 128 or d <= 0 or 128 % d != 0:
        return 1
    f = 128 // d
    while f > 1 and batch % f != 0:
        f //= 2
    return f


def _pick_tiles(batch, d, itemsize, budget):
    """Pick (tm, tn): double-buffered x/out tiles + one-hot intermediates fit `budget`."""
    sub = max(8, 32 // itemsize)              # sublane packing: 8 f32 / 16 bf16 / 32 int8
    tn_cands = [d] if d <= 512 else [512, 256, 128]
    best = None
    for tn in tn_cands:
        onehot = d * tn * (4 + 4 + itemsize)  # int32 iota + compare mask + one-hot slice
        per_row = 2 * d * itemsize            # x tile (full K), double-buffered
        per_row += 2 * tn * itemsize          # out tile, double-buffered
        per_row += tn * 4                     # f32 dot result before astype
        avail = budget - onehot
        if avail <= 0:
            continue
        tm = min(avail // per_row, batch, 1024)
        if tm >= batch:
            tm = batch
        else:
            tm = min(batch, max(sub, (tm // sub) * sub))
        if best is None or tm > best[0]:
            best = (int(tm), int(tn))
        if tm >= min(batch, 64):
            break                              # widest tn already gives a healthy batch tile
    if best is None:
        # TODO(synk): very large d — add a K-tiled accumulator or a gather path.
        best = (int(min(batch, sub)), int(min(d, 128)))
    return best


def permutation_forward(x, perm, *, block_m=None, block_n=None):
    """Pallas equivalent of Permutation.forward: returns x[:, perm]."""
    batch, d = x.shape
    orig_dtype = x.dtype
    if not jnp.issubdtype(orig_dtype, jnp.floating):
        # v7x MXU has no integer path; exact for |x| < 2**24.
        x = x.astype(jnp.float32)
    itemsize = jnp.dtype(x.dtype).itemsize
    perm = jnp.asarray(perm, dtype=jnp.int32)

    # Small-d folding: make the output last dim lane-dense (128 wide).
    f = _fold_factor(batch, d)
    if f > 1:
        x_e = x.reshape(batch // f, f * d)
        perm_e = (perm[None, :]
                  + (jnp.arange(f, dtype=jnp.int32) * d)[:, None]).reshape(-1)
    else:
        x_e, perm_e = x, perm
    b_e, d_e = x_e.shape

    cap = _vmem_capacity_bytes()
    vmem_limit = int(min(cap * 3 // 4, 100 << 20))   # 48 MiB on v7x, 96 MiB on v5e/v6e
    budget = vmem_limit * 7 // 10                    # headroom for Mosaic internals
    tm, tn = _pick_tiles(b_e, d_e, itemsize, budget)
    if block_m is not None:
        tm = block_m
    if block_n is not None:
        tn = block_n

    precision = (jax.lax.Precision.HIGHEST
                 if jnp.dtype(x.dtype) == jnp.dtype(jnp.float32) else None)
    kernel = functools.partial(_permute_kernel, precision=precision)

    grid = (pl.cdiv(b_e, tm), pl.cdiv(d_e, tn))
    cost = pl.CostEstimate(
        flops=2 * b_e * d_e * d_e,
        transcendentals=0,
        bytes_accessed=2 * b_e * d_e * itemsize + d_e * 4,
    )

    out = pl.pallas_call(
        kernel,
        out_shape=jax.ShapeDtypeStruct((b_e, d_e), x.dtype),
        grid_spec=pltpu.PrefetchScalarGridSpec(
            num_scalar_prefetch=0,
            grid=grid,
            in_specs=[
                pl.BlockSpec((1, tn), lambda i, j: (0, j)),     # perm slice (tiny)
                pl.BlockSpec((tm, d_e), lambda i, j: (i, 0)),   # x batch tile (full K)
            ],
            out_specs=pl.BlockSpec((tm, tn), lambda i, j: (i, j)),
        ),
        compiler_params=pltpu.CompilerParams(
            # Batch axis split across TensorCores; feature axis stays local so
            # each core's resident x tile is never re-read.
            dimension_semantics=("parallel", "arbitrary"),
            vmem_limit_bytes=vmem_limit,
        ),
        cost_estimate=cost,
    )(perm_e.reshape(1, d_e), x_e)

    out = out.reshape(batch, d)
    if out.dtype != orig_dtype:
        out = out.astype(orig_dtype)
    return out


class Permutation:
    """Pallas/JAX equivalent of the PyTorch Permutation flow layer."""

    def __init__(self, layer_dim, key):
        assert layer_dim % 2 == 0
        self.layer_dim = layer_dim
        # Buffers (like register_buffer): permutation and its cached inverse.
        self.permutation = jax.random.permutation(key, layer_dim)
        self.inverse_permutation = jnp.argsort(self.permutation)

    def forward(self, x):
        return permutation_forward(x, self.permutation)

    def inverse(self, x):
        return permutation_forward(x, self.inverse_permutation)

    def log_det_jacobian(self, x):
        # Pure glue, no kernel needed (zero log-det Jacobian).
        return jnp.zeros((x.shape[0],), dtype=jnp.float32)


if __name__ == "__main__":
    key = jax.random.PRNGKey(0)
    kx, kp, kx2, kp2, kx3, kp3 = jax.random.split(key, 6)

    # --- Small module-sized test (batch=8, layer_dim=32): exercises the
    # small-d folding path (output lane dim folded to 128). ---
    batch, layer_dim = 8, 32
    layer = Permutation(layer_dim, kp)
    x = jax.random.normal(kx, (batch, layer_dim), dtype=jnp.float32)

    y = jax.block_until_ready(layer.forward(x))
    assert jnp.allclose(y, x[:, layer.permutation]), "forward mismatch"

    x_back = jax.block_until_ready(layer.inverse(y))
    assert jnp.allclose(x_back, x), "inverse(forward(x)) != x"

    ldj = jax.block_until_ready(layer.log_det_jacobian(x))
    assert ldj.shape == (batch,) and bool(jnp.all(ldj == 0.0))

    # --- Multi-block grid on both axes, partial batch block and partial
    # feature block (masked writeback path). ---
    b2, d2 = 20, 320
    layer2 = Permutation(d2, kp2)
    x2 = jax.random.normal(kx2, (b2, d2), dtype=jnp.float32)
    y2 = jax.block_until_ready(
        permutation_forward(x2, layer2.permutation, block_m=8, block_n=128))
    assert jnp.allclose(y2, x2[:, layer2.permutation]), "tiled forward mismatch"

    # --- bf16 path: default MXU precision, still exact for a one-hot operand. ---
    b3, d3 = 16, 256
    layer3 = Permutation(d3, kp3)
    x3 = jax.random.normal(kx3, (b3, d3), dtype=jnp.bfloat16)
    y3 = jax.block_until_ready(layer3.forward(x3))
    assert jnp.array_equal(y3, x3[:, layer3.permutation]), "bf16 forward mismatch"

    print("KERNEL_OK")
</pallas_src>

<mosaic_0001>
module attributes {stable_mosaic.version = 11 : i64} {
  func.func @_permute_kernel(%arg0: i32, %arg1: i32, %arg2: memref<1x128xi32, #tpu.memory_space<vmem>>, %arg3: memref<2x128xf32, #tpu.memory_space<vmem>>, %arg4: memref<2x128xf32, #tpu.memory_space<vmem>>) attributes {dimension_semantics = [#tpu.dimension_semantics<parallel>, #tpu.dimension_semantics<arbitrary>], iteration_bounds = array<i64: 1, 1>, scalar_prefetch = 0 : i64, scratch_operands = 0 : i64, tpu.core_type = #tpu.core_type<tc>, window_params = [{transform_indices = @transform_0, window_bounds = array<i64: 1, 128>}, {transform_indices = @transform_1, window_bounds = array<i64: 2, 128>}, {transform_indices = @transform_2, window_bounds = array<i64: 2, 128>}]} {
    %0 = tpu.iota {dimensions = array<i32: 0>} : vector<128x128xi32>
    %c0 = arith.constant 0 : index
    %c0_0 = arith.constant 0 : index
    %1 = vector.load %arg2[%c0, %c0_0] : memref<1x128xi32, #tpu.memory_space<vmem>>, vector<1x128xi32>
    %2 = vector.broadcast %1 : vector<1x128xi32> to vector<128x128xi32>
    %3 = arith.cmpi eq, %0, %2 : vector<128x128xi32>
    %4 = arith.extui %3 : vector<128x128xi1> to vector<128x128xi32>
    %5 = arith.sitofp %4 : vector<128x128xi32> to vector<128x128xf32>
    %c0_1 = arith.constant 0 : index
    %c0_2 = arith.constant 0 : index
    %6 = vector.load %arg3[%c0_1, %c0_2] : memref<2x128xf32, #tpu.memory_space<vmem>>, vector<2x128xf32>
    %cst = arith.constant dense<0.000000e+00> : vector<2x128xf32>
    %7 = tpu.matmul %6, %5, %cst {dimension_numbers = #tpu.dot_dimension_numbers<[1], [0], [0], [1], [0, 0, 1, 1], [], []>, precision = #tpu.contract_precision<fp32>} : vector<2x128xf32>, vector<128x128xf32>, vector<2x128xf32> -> vector<2x128xf32>
    %c0_3 = arith.constant 0 : index
    %c0_4 = arith.constant 0 : index
    %8 = vector.load %arg4[%c0_3, %c0_4] : memref<2x128xf32, #tpu.memory_space<vmem>>, vector<2x128xf32>
    tpu.vector_store %arg4[%c0_3, %c0_4], %7 {strides = array<i32>} : memref<2x128xf32, #tpu.memory_space<vmem>>, vector<2x128xf32>,
    return
  }
  func.func @transform_0(%arg0: i32, %arg1: i32) -> (i32, i32) {
    %c0_i32 = arith.constant 0 : i32
    %c0_i32_0 = arith.constant 0 : i32
    return %c0_i32, %arg1 : i32, i32
  }
  func.func @transform_1(%arg0: i32, %arg1: i32) -> (i32, i32) {
    %c0_i32 = arith.constant 0 : i32
    %c0_i32_0 = arith.constant 0 : i32
    return %arg0, %c0_i32 : i32, i32
  }
  func.func @transform_2(%arg0: i32, %arg1: i32) -> (i32, i32) {
    %c0_i32 = arith.constant 0 : i32
    return %arg0, %arg1 : i32, i32
  }
}

</mosaic_0001>

<llo_original>
// kernel: tpu_custom_call.1
$region0: #{tpu_custom_call.1}
  #allocation0 [shape = 'u32[]', space=smem, size = 0x4, offset = 0x4, fixed_abs, tag = 'smem constant byte address 0x4 - core index']
  #allocation1 [shape = 'u32[144,128]{1,0:T(1,128)}', space=vmem, size = 0x12000, scoped, tag = 'internal scratch']
  %s0 = inlined_call_operand.hbm [shape: s32[1,128], index: 0, kind: input, shape index: {}]
  %s1 = inlined_call_operand.vmem [shape: f32[2,128], index: 1, kind: input, shape index: {}]
  %s2 = inlined_call_operand.hbm [shape: f32[2,128], index: 2, kind: output, shape index: {}]
  %s3 = sld [smem:[#allocation0]]
  $region22: #{tpu_custom_call.1} parent=0
    _
  %s5 = ssub.s32 1, %s3
  %s6 = scalar_select 0, %s5, %s3
  $region1: #{tpu_custom_call.1} parent=0
    #allocation2 [shape = 'u8[512]{0}', space=vmem, size = 0x400, scoped, tag = 'input window, operand 0, single buffered']
    #allocation3 [shape = 's32[1]{0}', space=sflag, size = 0x4, scoped, tag = 'scoped memory for tpu_custom_call.1']
    #allocation4 [shape = 's32[1]{0}', space=sflag, size = 0x4, scoped, tag = 'scoped memory for tpu_custom_call.1']
    #allocation5 [shape = 'u8[1024]{0}', space=vmem, size = 0x400, scoped, tag = 'output window, operand 0, single buffered']
    %7 = vsyncpa [#allocation3], 0
    %8 = vsyncpa [#allocation4], 0
    // Predicated region
    $region2: #{tpu_custom_call.1} parent=1 // pred_check
      _
    $region3: #{tpu_custom_call.1} parent=1 // pred_check_branch
      %10 = sbr.rel (0) target = $region5
    $region4: #{tpu_custom_call.1} parent=1 // pred_region
      %s12 = ssub.s32 16, 16
      %13 = vsyncadd [#allocation3], %s12
      %s15 = sshll.u32 [#allocation2], 4
      %s16 = int_to_ptr.vmem [resolvable:$true] %s15
      %18 = dma.hbm_to_vmem [thread:$0]  %s0, 16, %s16, [#allocation3]
    $region5: #{tpu_custom_call.1} parent=1 // pred_fallthru
      _
    // Predicated region
    $region6: #{tpu_custom_call.1} parent=1 // pred_check
      _
    $region7: #{tpu_custom_call.1} parent=1 // pred_check_branch
      %20 = sbr.rel (0) target = $region9
    $region8: #{tpu_custom_call.1} parent=1 // pred_region
      _
    $region9: #{tpu_custom_call.1} parent=1 // pred_fallthru
      _
    // Predicated region
    $region10: #{tpu_custom_call.1} parent=1 // pred_check
      _
    $region11: #{tpu_custom_call.1} parent=1 // pred_check_branch
      %22 = sbr.rel (0) target = $region13
    $region12: #{tpu_custom_call.1} parent=1 // pred_region
      %23 = dma.done [#allocation3], 16
    $region13: #{tpu_custom_call.1} parent=1 // pred_fallthru
      _
    %v24 = vlaneseq
    %v25 = vshrl.u32 %v24, 7
    %v26 = vadd.s32 %v25, 8
    %v27 = vadd.s32 %v25, 16
    %v28 = vadd.s32 %v25, 24
    %v29 = vadd.s32 %v25, 32
    %v30 = vadd.s32 %v25, 40
    %v31 = vadd.s32 %v25, 48
    %v32 = vadd.s32 %v25, 56
    %v33 = vadd.s32 %v25, 64
    %v34 = vadd.s32 %v25, 72
    %v35 = vadd.s32 %v25, 80
    %v36 = vadd.s32 %v25, 88
    %v37 = vadd.s32 %v25, 96
    %v38 = vadd.s32 %v25, 104
    %v39 = vadd.s32 %v25, 112
    %v40 = vadd.s32 %v25, 120
    %v41 = vld [vmem:[#allocation2] sm:$0x1]
    %v42 = vlaneseq
    %v43 = vshrl.u32 %v42, 7
    %v44 = vsub.s32 0, %v43
    %v45 = vrot.slane %v41, %v44
    %vm46 = vcmp.eq.s32.totalorder %v25, %v45
    %vm47 = vcmp.eq.s32.totalorder %v26, %v45
    %vm48 = vcmp.eq.s32.totalorder %v27, %v45
    %vm49 = vcmp.eq.s32.totalorder %v28, %v45
    %vm50 = vcmp.eq.s32.totalorder %v29, %v45
    %vm51 = vcmp.eq.s32.totalorder %v30, %v45
    %vm52 = vcmp.eq.s32.totalorder %v31, %v45
    %vm53 = vcmp.eq.s32.totalorder %v32, %v45
    %vm54 = vcmp.eq.s32.totalorder %v33, %v45
    %vm55 = vcmp.eq.s32.totalorder %v34, %v45
    %vm56 = vcmp.eq.s32.totalorder %v35, %v45
    %vm57 = vcmp.eq.s32.totalorder %v36, %v45
    %vm58 = vcmp.eq.s32.totalorder %v37, %v45
    %vm59 = vcmp.eq.s32.totalorder %v38, %v45
    %vm60 = vcmp.eq.s32.totalorder %v39, %v45
    %vm61 = vcmp.eq.s32.totalorder %v40, %v45
    %v62 = vsel %vm46, 1, 0
    %v63 = vsel %vm47, 1, 0
    %v64 = vsel %vm48, 1, 0
    %v65 = vsel %vm49, 1, 0
    %v66 = vsel %vm50, 1, 0
    %v67 = vsel %vm51, 1, 0
    %v68 = vsel %vm52, 1, 0
    %v69 = vsel %vm53, 1, 0
    %v70 = vsel %vm54, 1, 0
    %v71 = vsel %vm55, 1, 0
    %v72 = vsel %vm56, 1, 0
    %v73 = vsel %vm57, 1, 0
    %v74 = vsel %vm58, 1, 0
    %v75 = vsel %vm59, 1, 0
    %v76 = vsel %vm60, 1, 0
    %v77 = vsel %vm61, 1, 0
    %v78 = vcvt.s32.f32 %v62
    %v79 = vcvt.s32.f32 %v63
    %v80 = vcvt.s32.f32 %v64
    %v81 = vcvt.s32.f32 %v65
    %v82 = vcvt.s32.f32 %v66
    %v83 = vcvt.s32.f32 %v67
    %v84 = vcvt.s32.f32 %v68
    %v85 = vcvt.s32.f32 %v69
    %v86 = vcvt.s32.f32 %v70
    %v87 = vcvt.s32.f32 %v71
    %v88 = vcvt.s32.f32 %v72
    %v89 = vcvt.s32.f32 %v73
    %v90 = vcvt.s32.f32 %v74
    %v91 = vcvt.s32.f32 %v75
    %v92 = vcvt.s32.f32 %v76
    %v93 = vcvt.s32.f32 %v77
    %v94 = vld [vmem:[%s1] sm:$0x3]
    %95 = vmatprep.subr.mxu0 0.0
    %v96 = vand.u32 %v78, 4294901760
    %97 = vmatpush1.msra.mxu0 %v96
    %98 = vmatprep.subr.mxu0 0.0
    %v99 = vand.u32 %v79, 4294901760
    %100 = vmatpush1.msra.mxu0 %v99
    %101 = vmatprep.subr.mxu0 0.0
    %v102 = vand.u32 %v80, 4294901760
    %103 = vmatpush1.msra.mxu0 %v102
    %104 = vmatprep.subr.mxu0 0.0
    %v105 = vand.u32 %v81, 4294901760
    %106 = vmatpush1.msra.mxu0 %v105
    %107 = vmatprep.subr.mxu0 0.0
    %v108 = vand.u32 %v82, 4294901760
    %109 = vmatpush1.msra.mxu0 %v108
    %110 = vmatprep.subr.mxu0 0.0
    %v111 = vand.u32 %v83, 4294901760
    %112 = vmatpush1.msra.mxu0 %v111
    %113 = vmatprep.subr.mxu0 0.0
    %v114 = vand.u32 %v84, 4294901760
    %115 = vmatpush1.msra.mxu0 %v114
    %116 = vmatprep.subr.mxu0 0.0
    %v117 = vand.u32 %v85, 4294901760
    %118 = vmatpush1.msra.mxu0 %v117
    %119 = vmatprep.subr.mxu0 0.0
    %v120 = vand.u32 %v86, 4294901760
    %121 = vmatpush1.msra.mxu0 %v120
    %122 = vmatprep.subr.mxu0 0.0
    %v123 = vand.u32 %v87, 4294901760
    %124 = vmatpush1.msra.mxu0 %v123
    %125 = vmatprep.subr.mxu0 0.0
    %v126 = vand.u32 %v88, 4294901760
    %127 = vmatpush1.msra.mxu0 %v126
    %128 = vmatprep.subr.mxu0 0.0
    %v129 = vand.u32 %v89, 4294901760
    %130 = vmatpush1.msra.mxu0 %v129
    %131 = vmatprep.subr.mxu0 0.0
    %v132 = vand.u32 %v90, 4294901760
    %133 = vmatpush1.msra.mxu0 %v132
    %134 = vmatprep.subr.mxu0 0.0
    %v135 = vand.u32 %v91, 4294901760
    %136 = vmatpush1.msra.mxu0 %v135
    %137 = vmatprep.subr.mxu0 0.0
    %v138 = vand.u32 %v92, 4294901760
    %139 = vmatpush1.msra.mxu0 %v138
    %140 = vmatprep.subr.mxu0 0.0
    %v141 = vand.u32 %v93, 4294901760
    %142 = vmatpush1.msra.mxu0 %v141
    %143 = vmatprep.subr.mxu0 0.0
    %144 = vmatpush1.msra.mxu0 0.0
    %145 = vmatprep.subr.mxu0 0.0
    %146 = vmatpush1.msra.mxu0 0.0
    %147 = vmatprep.subr.mxu0 0.0
    %148 = vmatpush1.msra.mxu0 0.0
    %149 = vmatprep.subr.mxu0 0.0
    %150 = vmatpush1.msra.mxu0 0.0
    %151 = vmatprep.subr.mxu0 0.0
    %152 = vmatpush1.msra.mxu0 0.0
    %153 = vmatprep.subr.mxu0 0.0
    %154 = vmatpush1.msra.mxu0 0.0
    %155 = vmatprep.subr.mxu0 0.0
    %156 = vmatpush1.msra.mxu0 0.0
    %157 = vmatprep.subr.mxu0 0.0
    %158 = vmatpush1.msra.mxu0 0.0
    %159 = vmatprep.subr.mxu0 0.0
    %160 = vmatpush1.msra.mxu0 0.0
    %161 = vmatprep.subr.mxu0 0.0
    %162 = vmatpush1.msra.mxu0 0.0
    %163 = vmatprep.subr.mxu0 0.0
    %164 = vmatpush1.msra.mxu0 0.0
    %165 = vmatprep.subr.mxu0 0.0
    %166 = vmatpush1.msra.mxu0 0.0
    %167 = vmatprep.subr.mxu0 0.0
    %168 = vmatpush1.msra.mxu0 0.0
    %169 = vmatprep.subr.mxu0 0.0
    %170 = vmatpush1.msra.mxu0 0.0
    %171 = vmatprep.subr.mxu0 0.0
    %172 = vmatpush1.msra.mxu0 0.0
    %173 = vmatprep.subr.mxu0 0.0
    %174 = vmatpush1.msra.mxu0 0.0
    %175 = vmatprep.mubr.f32.mxu0 0.0
    %v176 = vand.u32 %v94, 4294901760
    %v177 = vsub.f32 %v94, %v176
    %v178 = vand.u32 %v177, 4294901760
    %v179 = vsub.f32 %v177, %v178
    %v180 = vand.u32 %v179, 4294901760
    %181 = vmatmul.mubr.f32.gmra.mrb[0].mxu0 %v180
    %v182 = vpop.f32.mrb[0].mxu0
    %v183 = vadd.f32 0.0, %v182
    %v184 = vpop.f32.mrb[0].mxu0
    %185 = vdwg.mxu0
    %186 = vmatprep.subr.mxu0 0.0
    %v187 = vand.u32 %v78, 4294901760
    %v188 = vsub.f32 %v78, %v187
    %v189 = vand.u32 %v188, 4294901760
    %v190 = vsub.f32 %v188, %v189
    %v191 = vand.u32 %v190, 4294901760
    %192 = vmatpush1.msra.mxu0 %v191
    %193 = vmatprep.subr.mxu0 0.0
    %v194 = vand.u32 %v79, 4294901760
    %v195 = vsub.f32 %v79, %v194
    %v196 = vand.u32 %v195, 4294901760
    %v197 = vsub.f32 %v195, %v196
    %v198 = vand.u32 %v197, 4294901760
    %199 = vmatpush1.msra.mxu0 %v198
    %200 = vmatprep.subr.mxu0 0.0
    %v201 = vand.u32 %v80, 4294901760
    %v202 = vsub.f32 %v80, %v201
    %v203 = vand.u32 %v202, 4294901760
    %v204 = vsub.f32 %v202, %v203
    %v205 = vand.u32 %v204, 4294901760
    %206 = vmatpush1.msra.mxu0 %v205
    %207 = vmatprep.subr.mxu0 0.0
    %v208 = vand.u32 %v81, 4294901760
    %v209 = vsub.f32 %v81, %v208
    %v210 = vand.u32 %v209, 4294901760
    %v211 = vsub.f32 %v209, %v210
    %v212 = vand.u32 %v211, 4294901760
    %213 = vmatpush1.msra.mxu0 %v212
    %214 = vmatprep.subr.mxu0 0.0
    %v215 = vand.u32 %v82, 4294901760
    %v216 = vsub.f32 %v82, %v215
    %v217 = vand.u32 %v216, 4294901760
    %v218 = vsub.f32 %v216, %v217
    %v219 = vand.u32 %v218, 4294901760
    %220 = vmatpush1.msra.mxu0 %v219
    %221 = vmatprep.subr.mxu0 0.0
    %v222 = vand.u32 %v83, 4294901760
    %v223 = vsub.f32 %v83, %v222
    %v224 = vand.u32 %v223, 4294901760
    %v225 = vsub.f32 %v223, %v224
    %v226 = vand.u32 %v225, 4294901760
    %227 = vmatpush1.msra.mxu0 %v226
    %228 = vmatprep.subr.mxu0 0.0
    %v229 = vand.u32 %v84, 4294901760
    %v230 = vsub.f32 %v84, %v229
    %v231 = vand.u32 %v230, 4294901760
    %v232 = vsub.f32 %v230, %v231
    %v233 = vand.u32 %v232, 4294901760
    %234 = vmatpush1.msra.mxu0 %v233
    %235 = vmatprep.subr.mxu0 0.0
    %v236 = vand.u32 %v85, 4294901760
    %v237 = vsub.f32 %v85, %v236
    %v238 = vand.u32 %v237, 4294901760
    %v239 = vsub.f32 %v237, %v238
    %v240 = vand.u32 %v239, 4294901760
    %241 = vmatpush1.msra.mxu0 %v240
    %242 = vmatprep.subr.mxu0 0.0
    %v243 = vand.u32 %v86, 4294901760
    %v244 = vsub.f32 %v86, %v243
    %v245 = vand.u32 %v244, 4294901760
    %v246 = vsub.f32 %v244, %v245
    %v247 = vand.u32 %v246, 4294901760
    %248 = vmatpush1.msra.mxu0 %v247
    %249 = vmatprep.subr.mxu0 0.0
    %v250 = vand.u32 %v87, 4294901760
    %v251 = vsub.f32 %v87, %v250
    %v252 = vand.u32 %v251, 4294901760
    %v253 = vsub.f32 %v251, %v252
    %v254 = vand.u32 %v253, 4294901760
    %255 = vmatpush1.msra.mxu0 %v254
    %256 = vmatprep.subr.mxu0 0.0
    %v257 = vand.u32 %v88, 4294901760
    %v258 = vsub.f32 %v88, %v257
    %v259 = vand.u32 %v258, 4294901760
    %v260 = vsub.f32 %v258, %v259
    %v261 = vand.u32 %v260, 4294901760
    %262 = vmatpush1.msra.mxu0 %v261
    %263 = vmatprep.subr.mxu0 0.0
    %v264 = vand.u32 %v89, 4294901760
    %v265 = vsub.f32 %v89, %v264
    %v266 = vand.u32 %v265, 4294901760
    %v267 = vsub.f32 %v265, %v266
    %v268 = vand.u32 %v267, 4294901760
    %269 = vmatpush1.msra.mxu0 %v268
    %270 = vmatprep.subr.mxu0 0.0
    %v271 = vand.u32 %v90, 4294901760
    %v272 = vsub.f32 %v90, %v271
    %v273 = vand.u32 %v272, 4294901760
    %v274 = vsub.f32 %v272, %v273
    %v275 = vand.u32 %v274, 4294901760
    %276 = vmatpush1.msra.mxu0 %v275
    %277 = vmatprep.subr.mxu0 0.0
    %v278 = vand.u32 %v91, 4294901760
    %v279 = vsub.f32 %v91, %v278
    %v280 = vand.u32 %v279, 4294901760
    %v281 = vsub.f32 %v279, %v280
    %v282 = vand.u32 %v281, 4294901760
    %283 = vmatpush1.msra.mxu0 %v282
    %284 = vmatprep.subr.mxu0 0.0
    %v285 = vand.u32 %v92, 4294901760
    %v286 = vsub.f32 %v92, %v285
    %v287 = vand.u32 %v286, 4294901760
    %v288 = vsub.f32 %v286, %v287
    %v289 = vand.u32 %v288, 4294901760
    %290 = vmatpush1.msra.mxu0 %v289
    %291 = vmatprep.subr.mxu0 0.0
    %v292 = vand.u32 %v93, 4294901760
    %v293 = vsub.f32 %v93, %v292
    %v294 = vand.u32 %v293, 4294901760
    %v295 = vsub.f32 %v293, %v294
    %v296 = vand.u32 %v295, 4294901760
    %297 = vmatpush1.msra.mxu0 %v296
    %298 = vmatprep.subr.mxu0 0.0
    %299 = vmatpush1.msra.mxu0 0.0
    %300 = vmatprep.subr.mxu0 0.0
    %301 = vmatpush1.msra.mxu0 0.0
    %302 = vmatprep.subr.mxu0 0.0
    %303 = vmatpush1.msra.mxu0 0.0
    %304 = vmatprep.subr.mxu0 0.0
    %305 = vmatpush1.msra.mxu0 0.0
    %306 = vmatprep.subr.mxu0 0.0
    %307 = vmatpush1.msra.mxu0 0.0
    %308 = vmatprep.subr.mxu0 0.0
    %309 = vmatpush1.msra.mxu0 0.0
    %310 = vmatprep.subr.mxu0 0.0
    %311 = vmatpush1.msra.mxu0 0.0
    %312 = vmatprep.subr.mxu0 0.0
    %313 = vmatpush1.msra.mxu0 0.0
    %314 = vmatprep.subr.mxu0 0.0
    %315 = vmatpush1.msra.mxu0 0.0
    %316 = vmatprep.subr.mxu0 0.0
    %317 = vmatpush1.msra.mxu0 0.0
    %318 = vmatprep.subr.mxu0 0.0
    %319 = vmatpush1.msra.mxu0 0.0
    %320 = vmatprep.subr.mxu0 0.0
    %321 = vmatpush1.msra.mxu0 0.0
    %322 = vmatprep.subr.mxu0 0.0
    %323 = vmatpush1.msra.mxu0 0.0
    %324 = vmatprep.subr.mxu0 0.0
    %325 = vmatpush1.msra.mxu0 0.0
    %326 = vmatprep.subr.mxu0 0.0
    %327 = vmatpush1.msra.mxu0 0.0
    %328 = vmatprep.subr.mxu0 0.0
    %329 = vmatpush1.msra.mxu0 0.0
    %330 = vmatprep.mubr.f32.mxu0 0.0
    %v331 = vand.u32 %v94, 4294901760
    %332 = vmatmul.mubr.f32.gmra.mrb[0].mxu0 %v331
    %v333 = vpop.f32.mrb[0].mxu0
    %v334 = vadd.f32 %v183, %v333
    %v335 = vpop.f32.mrb[0].mxu0
    %336 = vdwg.mxu0
    %337 = vmatprep.subr.mxu0 0.0
    %v338 = vand.u32 %v78, 4294901760
    %v339 = vsub.f32 %v78, %v338
    %340 = vmatpush1.msra.mxu0 %v339
    %341 = vmatprep.subr.mxu0 0.0
    %v342 = vand.u32 %v79, 4294901760
    %v343 = vsub.f32 %v79, %v342
    %344 = vmatpush1.msra.mxu0 %v343
    %345 = vmatprep.subr.mxu0 0.0
    %v346 = vand.u32 %v80, 4294901760
    %v347 = vsub.f32 %v80, %v346
    %348 = vmatpush1.msra.mxu0 %v347
    %349 = vmatprep.subr.mxu0 0.0
    %v350 = vand.u32 %v81, 4294901760
    %v351 = vsub.f32 %v81, %v350
    %352 = vmatpush1.msra.mxu0 %v351
    %353 = vmatprep.subr.mxu0 0.0
    %v354 = vand.u32 %v82, 4294901760
    %v355 = vsub.f32 %v82, %v354
    %356 = vmatpush1.msra.mxu0 %v355
    %357 = vmatprep.subr.mxu0 0.0
    %v358 = vand.u32 %v83, 4294901760
    %v359 = vsub.f32 %v83, %v358
    %360 = vmatpush1.msra.mxu0 %v359
    %361 = vmatprep.subr.mxu0 0.0
    %v362 = vand.u32 %v84, 4294901760
    %v363 = vsub.f32 %v84, %v362
    %364 = vmatpush1.msra.mxu0 %v363
    %365 = vmatprep.subr.mxu0 0.0
    %v366 = vand.u32 %v85, 4294901760
    %v367 = vsub.f32 %v85, %v366
    %368 = vmatpush1.msra.mxu0 %v367
    %369 = vmatprep.subr.mxu0 0.0
    %v370 = vand.u32 %v86, 4294901760
    %v371 = vsub.f32 %v86, %v370
    %372 = vmatpush1.msra.mxu0 %v371
    %373 = vmatprep.subr.mxu0 0.0
    %v374 = vand.u32 %v87, 4294901760
    %v375 = vsub.f32 %v87, %v374
    %376 = vmatpush1.msra.mxu0 %v375
    %377 = vmatprep.subr.mxu0 0.0
    %v378 = vand.u32 %v88, 4294901760
    %v379 = vsub.f32 %v88, %v378
    %380 = vmatpush1.msra.mxu0 %v379
    %381 = vmatprep.subr.mxu0 0.0
    %v382 = vand.u32 %v89, 4294901760
    %v383 = vsub.f32 %v89, %v382
    %384 = vmatpush1.msra.mxu0 %v383
    %385 = vmatprep.subr.mxu0 0.0
    %v386 = vand.u32 %v90, 4294901760
    %v387 = vsub.f32 %v90, %v386
    %388 = vmatpush1.msra.mxu0 %v387
    %389 = vmatprep.subr.mxu0 0.0
    %v390 = vand.u32 %v91, 4294901760
    %v391 = vsub.f32 %v91, %v390
    %392 = vmatpush1.msra.mxu0 %v391
    %393 = vmatprep.subr.mxu0 0.0
    %v394 = vand.u32 %v92, 4294901760
    %v395 = vsub.f32 %v92, %v394
    %396 = vmatpush1.msra.mxu0 %v395
    %397 = vmatprep.subr.mxu0 0.0
    %v398 = vand.u32 %v93, 4294901760
    %v399 = vsub.f32 %v93, %v398
    %400 = vmatpush1.msra.mxu0 %v399
    %401 = vmatprep.subr.mxu0 0.0
    %402 = vmatpush1.msra.mxu0 0.0
    %403 = vmatprep.subr.mxu0 0.0
    %404 = vmatpush1.msra.mxu0 0.0
    %405 = vmatprep.subr.mxu0 0.0
    %406 = vmatpush1.msra.mxu0 0.0
    %407 = vmatprep.subr.mxu0 0.0
    %408 = vmatpush1.msra.mxu0 0.0
    %409 = vmatprep.subr.mxu0 0.0
    %410 = vmatpush1.msra.mxu0 0.0
    %411 = vmatprep.subr.mxu0 0.0
    %412 = vmatpush1.msra.mxu0 0.0
    %413 = vmatprep.subr.mxu0 0.0
    %414 = vmatpush1.msra.mxu0 0.0
    %415 = vmatprep.subr.mxu0 0.0
    %416 = vmatpush1.msra.mxu0 0.0
    %417 = vmatprep.subr.mxu0 0.0
    %418 = vmatpush1.msra.mxu0 0.0
    %419 = vmatprep.subr.mxu0 0.0
    %420 = vmatpush1.msra.mxu0 0.0
    %421 = vmatprep.subr.mxu0 0.0
    %422 = vmatpush1.msra.mxu0 0.0
    %423 = vmatprep.subr.mxu0 0.0
    %424 = vmatpush1.msra.mxu0 0.0
    %425 = vmatprep.subr.mxu0 0.0
    %426 = vmatpush1.msra.mxu0 0.0
    %427 = vmatprep.subr.mxu0 0.0
    %428 = vmatpush1.msra.mxu0 0.0
    %429 = vmatprep.subr.mxu0 0.0
    %430 = vmatpush1.msra.mxu0 0.0
    %431 = vmatprep.subr.mxu0 0.0
    %432 = vmatpush1.msra.mxu0 0.0
    %433 = vmatprep.mubr.f32.mxu0 0.0
    %v434 = vand.u32 %v94, 4294901760
    %v435 = vsub.f32 %v94, %v434
    %436 = vmatmul.mubr.f32.gmra.mrb[0].mxu0 %v435
    %v437 = vpop.f32.mrb[0].mxu0
    %v438 = vadd.f32 %v334, %v437
    %v439 = vpop.f32.mrb[0].mxu0
    %440 = vdwg.mxu0
    %441 = vmatprep.subr.mxu0 0.0
    %v442 = vand.u32 %v78, 4294901760
    %443 = vmatpush1.msra.mxu0 %v442
    %444 = vmatprep.subr.mxu0 0.0
    %v445 = vand.u32 %v79, 4294901760
    %446 = vmatpush1.msra.mxu0 %v445
    %447 = vmatprep.subr.mxu0 0.0
    %v448 = vand.u32 %v80, 4294901760
    %449 = vmatpush1.msra.mxu0 %v448
    %450 = vmatprep.subr.mxu0 0.0
    %v451 = vand.u32 %v81, 4294901760
    %452 = vmatpush1.msra.mxu0 %v451
    %453 = vmatprep.subr.mxu0 0.0
    %v454 = vand.u32 %v82, 4294901760
    %455 = vmatpush1.msra.mxu0 %v454
    %456 = vmatprep.subr.mxu0 0.0
    %v457 = vand.u32 %v83, 4294901760
    %458 = vmatpush1.msra.mxu0 %v457
    %459 = vmatprep.subr.mxu0 0.0
    %v460 = vand.u32 %v84, 4294901760
    %461 = vmatpush1.msra.mxu0 %v460
    %462 = vmatprep.subr.mxu0 0.0
    %v463 = vand.u32 %v85, 4294901760
    %464 = vmatpush1.msra.mxu0 %v463
    %465 = vmatprep.subr.mxu0 0.0
    %v466 = vand.u32 %v86, 4294901760
    %467 = vmatpush1.msra.mxu0 %v466
    %468 = vmatprep.subr.mxu0 0.0
    %v469 = vand.u32 %v87, 4294901760
    %470 = vmatpush1.msra.mxu0 %v469
    %471 = vmatprep.subr.mxu0 0.0
    %v472 = vand.u32 %v88, 4294901760
    %473 = vmatpush1.msra.mxu0 %v472
    %474 = vmatprep.subr.mxu0 0.0
    %v475 = vand.u32 %v89, 4294901760
    %476 = vmatpush1.msra.mxu0 %v475
    %477 = vmatprep.subr.mxu0 0.0
    %v478 = vand.u32 %v90, 4294901760
    %479 = vmatpush1.msra.mxu0 %v478
    %480 = vmatprep.subr.mxu0 0.0
    %v481 = vand.u32 %v91, 4294901760
    %482 = vmatpush1.msra.mxu0 %v481
    %483 = vmatprep.subr.mxu0 0.0
    %v484 = vand.u32 %v92, 4294901760
    %485 = vmatpush1.msra.mxu0 %v484
    %486 = vmatprep.subr.mxu0 0.0
    %v487 = vand.u32 %v93, 4294901760
    %488 = vmatpush1.msra.mxu0 %v487
    %489 = vmatprep.subr.mxu0 0.0
    %490 = vmatpush1.msra.mxu0 0.0
    %491 = vmatprep.subr.mxu0 0.0
    %492 = vmatpush1.msra.mxu0 0.0
    %493 = vmatprep.subr.mxu0 0.0
    %494 = vmatpush1.msra.mxu0 0.0
    %495 = vmatprep.subr.mxu0 0.0
    %496 = vmatpush1.msra.mxu0 0.0
    %497 = vmatprep.subr.mxu0 0.0
    %498 = vmatpush1.msra.mxu0 0.0
    %499 = vmatprep.subr.mxu0 0.0
    %500 = vmatpush1.msra.mxu0 0.0
    %501 = vmatprep.subr.mxu0 0.0
    %502 = vmatpush1.msra.mxu0 0.0
    %503 = vmatprep.subr.mxu0 0.0
    %504 = vmatpush1.msra.mxu0 0.0
    %505 = vmatprep.subr.mxu0 0.0
    %506 = vmatpush1.msra.mxu0 0.0
    %507 = vmatprep.subr.mxu0 0.0
    %508 = vmatpush1.msra.mxu0 0.0
    %509 = vmatprep.subr.mxu0 0.0
    %510 = vmatpush1.msra.mxu0 0.0
    %511 = vmatprep.subr.mxu0 0.0
    %512 = vmatpush1.msra.mxu0 0.0
    %513 = vmatprep.subr.mxu0 0.0
    %514 = vmatpush1.msra.mxu0 0.0
    %515 = vmatprep.subr.mxu0 0.0
    %516 = vmatpush1.msra.mxu0 0.0
    %517 = vmatprep.subr.mxu0 0.0
    %518 = vmatpush1.msra.mxu0 0.0
    %519 = vmatprep.subr.mxu0 0.0
    %520 = vmatpush1.msra.mxu0 0.0
    %521 = vmatprep.mubr.f32.mxu0 0.0
    %v522 = vand.u32 %v94, 4294901760
    %v523 = vsub.f32 %v94, %v522
    %v524 = vand.u32 %v523, 4294901760
    %525 = vmatmul.mubr.f32.gmra.mrb[0].mxu0 %v524
    %v526 = vpop.f32.mrb[0].mxu0
    %v527 = vadd.f32 %v438, %v526
    %v528 = vpop.f32.mrb[0].mxu0
    %529 = vdwg.mxu0
    %530 = vmatprep.subr.mxu0 0.0
    %v531 = vand.u32 %v78, 4294901760
    %v532 = vsub.f32 %v78, %v531
    %v533 = vand.u32 %v532, 4294901760
    %534 = vmatpush1.msra.mxu0 %v533
    %535 = vmatprep.subr.mxu0 0.0
    %v536 = vand.u32 %v79, 4294901760
    %v537 = vsub.f32 %v79, %v536
    %v538 = vand.u32 %v537, 4294901760
    %539 = vmatpush1.msra.mxu0 %v538
    %540 = vmatprep.subr.mxu0 0.0
    %v541 = vand.u32 %v80, 4294901760
    %v542 = vsub.f32 %v80, %v541
    %v543 = vand.u32 %v542, 4294901760
    %544 = vmatpush1.msra.mxu0 %v543
    %545 = vmatprep.subr.mxu0 0.0
    %v546 = vand.u32 %v81, 4294901760
    %v547 = vsub.f32 %v81, %v546
    %v548 = vand.u32 %v547, 4294901760
    %549 = vmatpush1.msra.mxu0 %v548
    %550 = vmatprep.subr.mxu0 0.0
    %v551 = vand.u32 %v82, 4294901760
    %v552 = vsub.f32 %v82, %v551
    %v553 = vand.u32 %v552, 4294901760
    %554 = vmatpush1.msra.mxu0 %v553
    %555 = vmatprep.subr.mxu0 0.0
    %v556 = vand.u32 %v83, 4294901760
    %v557 = vsub.f32 %v83, %v556
    %v558 = vand.u32 %v557, 4294901760
    %559 = vmatpush1.msra.mxu0 %v558
    %560 = vmatprep.subr.mxu0 0.0
    %v561 = vand.u32 %v84, 4294901760
    %v562 = vsub.f32 %v84, %v561
    %v563 = vand.u32 %v562, 4294901760
    %564 = vmatpush1.msra.mxu0 %v563
    %565 = vmatprep.subr.mxu0 0.0
    %v566 = vand.u32 %v85, 4294901760
    %v567 = vsub.f32 %v85, %v566
    %v568 = vand.u32 %v567, 4294901760
    %569 = vmatpush1.msra.mxu0 %v568
    %570 = vmatprep.subr.mxu0 0.0
    %v571 = vand.u32 %v86, 4294901760
    %v572 = vsub.f32 %v86, %v571
    %v573 = vand.u32 %v572, 4294901760
    %574 = vmatpush1.msra.mxu0 %v573
    %575 = vmatprep.subr.mxu0 0.0
    %v576 = vand.u32 %v87, 4294901760
    %v577 = vsub.f32 %v87, %v576
    %v578 = vand.u32 %v577, 4294901760
    %579 = vmatpush1.msra.mxu0 %v578
    %580 = vmatprep.subr.mxu0 0.0
    %v581 = vand.u32 %v88, 4294901760
    %v582 = vsub.f32 %v88, %v581
    %v583 = vand.u32 %v582, 4294901760
    %584 = vmatpush1.msra.mxu0 %v583
    %585 = vmatprep.subr.mxu0 0.0
    %v586 = vand.u32 %v89, 4294901760
    %v587 = vsub.f32 %v89, %v586
    %v588 = vand.u32 %v587, 4294901760
    %589 = vmatpush1.msra.mxu0 %v588
    %590 = vmatprep.subr.mxu0 0.0
    %v591 = vand.u32 %v90, 4294901760
    %v592 = vsub.f32 %v90, %v591
    %v593 = vand.u32 %v592, 4294901760
    %594 = vmatpush1.msra.mxu0 %v593
    %595 = vmatprep.subr.mxu0 0.0
    %v596 = vand.u32 %v91, 4294901760
    %v597 = vsub.f32 %v91, %v596
    %v598 = vand.u32 %v597, 4294901760
    %599 = vmatpush1.msra.mxu0 %v598
    %600 = vmatprep.subr.mxu0 0.0
    %v601 = vand.u32 %v92, 4294901760
    %v602 = vsub.f32 %v92, %v601
    %v603 = vand.u32 %v602, 4294901760
    %604 = vmatpush1.msra.mxu0 %v603
    %605 = vmatprep.subr.mxu0 0.0
    %v606 = vand.u32 %v93, 4294901760
    %v607 = vsub.f32 %v93, %v606
    %v608 = vand.u32 %v607, 4294901760
    %609 = vmatpush1.msra.mxu0 %v608
    %610 = vmatprep.subr.mxu0 0.0
    %611 = vmatpush1.msra.mxu0 0.0
    %612 = vmatprep.subr.mxu0 0.0
    %613 = vmatpush1.msra.mxu0 0.0
    %614 = vmatprep.subr.mxu0 0.0
    %615 = vmatpush1.msra.mxu0 0.0
    %616 = vmatprep.subr.mxu0 0.0
    %617 = vmatpush1.msra.mxu0 0.0
    %618 = vmatprep.subr.mxu0 0.0
    %619 = vmatpush1.msra.mxu0 0.0
    %620 = vmatprep.subr.mxu0 0.0
    %621 = vmatpush1.msra.mxu0 0.0
    %622 = vmatprep.subr.mxu0 0.0
    %623 = vmatpush1.msra.mxu0 0.0
    %624 = vmatprep.subr.mxu0 0.0
    %625 = vmatpush1.msra.mxu0 0.0
    %626 = vmatprep.subr.mxu0 0.0
    %627 = vmatpush1.msra.mxu0 0.0
    %628 = vmatprep.subr.mxu0 0.0
    %629 = vmatpush1.msra.mxu0 0.0
    %630 = vmatprep.subr.mxu0 0.0
    %631 = vmatpush1.msra.mxu0 0.0
    %632 = vmatprep.subr.mxu0 0.0
    %633 = vmatpush1.msra.mxu0 0.0
    %634 = vmatprep.subr.mxu0 0.0
    %635 = vmatpush1.msra.mxu0 0.0
    %636 = vmatprep.subr.mxu0 0.0
    %637 = vmatpush1.msra.mxu0 0.0
    %638 = vmatprep.subr.mxu0 0.0
    %639 = vmatpush1.msra.mxu0 0.0
    %640 = vmatprep.subr.mxu0 0.0
    %641 = vmatpush1.msra.mxu0 0.0
    %642 = vmatprep.mubr.f32.mxu0 0.0
    %v643 = vand.u32 %v94, 4294901760
    %644 = vmatmul.mubr.f32.gmra.mrb[0].mxu0 %v643
    %v645 = vpop.f32.mrb[0].mxu0
    %v646 = vadd.f32 %v527, %v645
    %v647 = vpop.f32.mrb[0].mxu0
    %648 = vdwg.mxu0
    %649 = vmatprep.subr.mxu0 0.0
    %v650 = vand.u32 %v78, 4294901760
    %651 = vmatpush1.msra.mxu0 %v650
    %652 = vmatprep.subr.mxu0 0.0
    %v653 = vand.u32 %v79, 4294901760
    %654 = vmatpush1.msra.mxu0 %v653
    %655 = vmatprep.subr.mxu0 0.0
    %v656 = vand.u32 %v80, 4294901760
    %657 = vmatpush1.msra.mxu0 %v656
    %658 = vmatprep.subr.mxu0 0.0
    %v659 = vand.u32 %v81, 4294901760
    %660 = vmatpush1.msra.mxu0 %v659
    %661 = vmatprep.subr.mxu0 0.0
    %v662 = vand.u32 %v82, 4294901760
    %663 = vmatpush1.msra.mxu0 %v662
    %664 = vmatprep.subr.mxu0 0.0
    %v665 = vand.u32 %v83, 4294901760
    %666 = vmatpush1.msra.mxu0 %v665
    %667 = vmatprep.subr.mxu0 0.0
    %v668 = vand.u32 %v84, 4294901760
    %669 = vmatpush1.msra.mxu0 %v668
    %670 = vmatprep.subr.mxu0 0.0
    %v671 = vand.u32 %v85, 4294901760
    %672 = vmatpush1.msra.mxu0 %v671
    %673 = vmatprep.subr.mxu0 0.0
    %v674 = vand.u32 %v86, 4294901760
    %675 = vmatpush1.msra.mxu0 %v674
    %676 = vmatprep.subr.mxu0 0.0
    %v677 = vand.u32 %v87, 4294901760
    %678 = vmatpush1.msra.mxu0 %v677
    %679 = vmatprep.subr.mxu0 0.0
    %v680 = vand.u32 %v88, 4294901760
    %681 = vmatpush1.msra.mxu0 %v680
    %682 = vmatprep.subr.mxu0 0.0
    %v683 = vand.u32 %v89, 4294901760
    %684 = vmatpush1.msra.mxu0 %v683
    %685 = vmatprep.subr.mxu0 0.0
    %v686 = vand.u32 %v90, 4294901760
    %687 = vmatpush1.msra.mxu0 %v686
    %688 = vmatprep.subr.mxu0 0.0
    %v689 = vand.u32 %v91, 4294901760
    %690 = vmatpush1.msra.mxu0 %v689
    %691 = vmatprep.subr.mxu0 0.0
    %v692 = vand.u32 %v92, 4294901760
    %693 = vmatpush1.msra.mxu0 %v692
    %694 = vmatprep.subr.mxu0 0.0
    %v695 = vand.u32 %v93, 4294901760
    %696 = vmatpush1.msra.mxu0 %v695
    %697 = vmatprep.subr.mxu0 0.0
    %698 = vmatpush1.msra.mxu0 0.0
    %699 = vmatprep.subr.mxu0 0.0
    %700 = vmatpush1.msra.mxu0 0.0
    %701 = vmatprep.subr.mxu0 0.0
    %702 = vmatpush1.msra.mxu0 0.0
    %703 = vmatprep.subr.mxu0 0.0
    %704 = vmatpush1.msra.mxu0 0.0
    %705 = vmatprep.subr.mxu0 0.0
    %706 = vmatpush1.msra.mxu0 0.0
    %707 = vmatprep.subr.mxu0 0.0
    %708 = vmatpush1.msra.mxu0 0.0
    %709 = vmatprep.subr.mxu0 0.0
    %710 = vmatpush1.msra.mxu0 0.0
    %711 = vmatprep.subr.mxu0 0.0
    %712 = vmatpush1.msra.mxu0 0.0
    %713 = vmatprep.subr.mxu0 0.0
    %714 = vmatpush1.msra.mxu0 0.0
    %715 = vmatprep.subr.mxu0 0.0
    %716 = vmatpush1.msra.mxu0 0.0
    %717 = vmatprep.subr.mxu0 0.0
    %718 = vmatpush1.msra.mxu0 0.0
    %719 = vmatprep.subr.mxu0 0.0
    %720 = vmatpush1.msra.mxu0 0.0
    %721 = vmatprep.subr.mxu0 0.0
    %722 = vmatpush1.msra.mxu0 0.0
    %723 = vmatprep.subr.mxu0 0.0
    %724 = vmatpush1.msra.mxu0 0.0
    %725 = vmatprep.subr.mxu0 0.0
    %726 = vmatpush1.msra.mxu0 0.0
    %727 = vmatprep.subr.mxu0 0.0
    %728 = vmatpush1.msra.mxu0 0.0
    %729 = vmatprep.mubr.f32.mxu0 0.0
    %v730 = vand.u32 %v94, 4294901760
    %731 = vmatmul.mubr.f32.gmra.mrb[0].mxu0 %v730
    %v732 = vpop.f32.mrb[0].mxu0
    %v733 = vadd.f32 %v646, %v732
    %v734 = vpop.f32.mrb[0].mxu0
    %735 = vdwg.mxu0
    %736 = vst [vmem:[#allocation5] sm:$0x3] %v733
    // Predicated region
    $region14: #{tpu_custom_call.1} parent=1 // pred_check
      _
    $region15: #{tpu_custom_call.1} parent=1 // pred_check_branch
      %738 = sbr.rel (0) target = $region17
    $region16: #{tpu_custom_call.1} parent=1 // pred_region
      %s740 = ssub.s32 32, 32
      %741 = vsyncadd [#allocation4], %s740
      %s743 = sshll.u32 [#allocation5], 4
      %s744 = int_to_ptr.vmem [resolvable:$true] %s743
      %746 = dma.vmem_to_hbm [thread:$0]  %s744, 32, %s2, [#allocation4]
    $region17: #{tpu_custom_call.1} parent=1 // pred_fallthru
      _
    // Predicated region
    $region18: #{tpu_custom_call.1} parent=1 // pred_check
      _
    $region19: #{tpu_custom_call.1} parent=1 // pred_check_branch
      %748 = sbr.rel (0) target = $region21
    $region20: #{tpu_custom_call.1} parent=1 // pred_region
      %749 = dma.done [#allocation4], 32
    $region21: #{tpu_custom_call.1} parent=1 // pred_fallthru
      _
    %750 = vsyncpa [#allocation3], 1
    %751 = vsyncpa [#allocation4], 1

</llo_original>
